<compile_context>
chip_gen: v7x
topology: tpu7x:2x2x1
jax: 0.10.0
libtpu: 0.0.40
codegen_flags: <defaults>
</compile_context>

<pallas_src>
import functools

import jax
import jax.numpy as jnp
from jax.experimental import pallas as pl
from jax.experimental.pallas import tpu as pltpu


def _round_up(x, m):
    return (x + m - 1) // m * m


def _cdiv(a, b):
    return -(-a // b)


# ---------------------------------------------------------------------------
# Kernels
# ---------------------------------------------------------------------------
def _linear_kernel_full_k(x_ref, w_ref, b_ref, o_ref):
    # x_ref: (TM, K)   w_ref: (K, Np)   b_ref: (1, Np)   o_ref: (TM, Np)
    # Single K tile: no accumulator scratch, direct lane-dense store.
    acc = jnp.dot(x_ref[...], w_ref[...], preferred_element_type=jnp.float32)
    o_ref[...] = (acc + b_ref[...].astype(jnp.float32)).astype(o_ref.dtype)


def _linear_kernel_tiled_k(x_ref, w_ref, b_ref, o_ref, acc_ref):
    # x_ref: (TM, TK)   w_ref: (TK, Np)   b_ref: (1, Np)
    # o_ref: (TM, Np)   acc_ref: (TM, Np) f32 scratch, resident across K axis.
    k = pl.program_id(1)

    @pl.when(k == 0)
    def _():
        acc_ref[...] = jnp.zeros_like(acc_ref)

    acc_ref[...] += jnp.dot(
        x_ref[...], w_ref[...], preferred_element_type=jnp.float32
    )

    @pl.when(k == pl.num_programs(1) - 1)
    def _():
        o_ref[...] = (
            acc_ref[...] + b_ref[...].astype(jnp.float32)
        ).astype(o_ref.dtype)


# ---------------------------------------------------------------------------
# Tiling / budgeting
# ---------------------------------------------------------------------------
def _vmem_capacity_bytes():
    try:
        info = pltpu.get_tpu_info()
        cap = getattr(info, "vmem_capacity_bytes", None)
        if cap:
            return int(cap)
    except Exception:
        pass
    return 64 * 1024 * 1024  # conservative (v7x-sized) fallback


def _choose_tiles(M, K, n_pad, itemsize, budget):
    """Pick (TM, TK, K_pad, k_tiles) under a per-generation VMEM budget."""
    # Keep full K resident (weight pinned in VMEM, no re-streaming per M tile)
    # whenever the double-buffered (K, n_pad) weight block fits ~40% of budget.
    if 2 * K * n_pad * itemsize <= 0.4 * budget:
        tk = K            # full-dim block: no K padding required
        k_pad = K
        k_tiles = 1
    else:
        tk = 512          # multiple of 256: keeps v6e/v7x 256x256 MXU fed
        k_pad = _round_up(K, tk)
        k_tiles = k_pad // tk

    w_bytes = 2 * n_pad * tk * itemsize   # double-buffered weight tile
    b_bytes = 2 * n_pad * 4               # double-buffered bias

    # Cap TM so v7x's two TensorCores both get an M tile when M allows it
    # (dimension_semantics "parallel" on the M axis); never exceed 1024.
    if M >= 16:
        tm_cap = min(1024, _round_up(_cdiv(M, 2), 8))
    else:
        tm_cap = _round_up(max(M, 8), 8)

    tm = 8
    for cand in (1024, 512, 256, 128, 64, 32, 16, 8):
        if cand > tm_cap:
            continue
        x_bytes = 2 * cand * tk * itemsize        # double-buffered x tile
        o_bytes = 2 * cand * n_pad * itemsize     # double-buffered out tile
        acc_bytes = cand * n_pad * 4 if k_tiles > 1 else 0
        if x_bytes + o_bytes + acc_bytes + w_bytes + b_bytes <= budget:
            tm = cand
            break
    return tm, tk, k_pad, k_tiles


# ---------------------------------------------------------------------------
# Wrapper
# ---------------------------------------------------------------------------
def downsampling_lp(inputs, weight, bias, *, input_dim, factor):
    """Pallas equivalent of Downsampling_LP.forward.

    inputs: (B, T, D) with D == input_dim and T % factor == 0
    weight: (input_dim, input_dim * factor)   (PyTorch nn.Linear layout)
    bias:   (input_dim,)
    returns (B, T // factor, input_dim)
    """
    B, T, D = inputs.shape
    assert D == input_dim
    assert T % factor == 0

    M = B * (T // factor)
    K = input_dim * factor
    N = input_dim

    dtype = inputs.dtype
    itemsize = jnp.dtype(dtype).itemsize

    # Lane-dense output: pad N up to a multiple of 128 only when needed.
    n_pad = _round_up(N, 128)

    # Per-generation VMEM budgets (physical: 128 MiB v5e/v6e, 64 MiB v7x).
    vmem_cap = _vmem_capacity_bytes()
    if vmem_cap >= 96 * 1024 * 1024:
        budget = 64 * 1024 * 1024
        limit_cap = 100 * 1024 * 1024
    else:
        budget = 26 * 1024 * 1024
        limit_cap = 44 * 1024 * 1024

    tm, tk, k_pad, k_tiles = _choose_tiles(M, K, n_pad, itemsize, budget)
    grid_m = _cdiv(M, tm)   # NO M padding: partial last block handled by OOB

    # --- conditional padding (K must be real zeros when K is tiled) ---------
    x2d = inputs.reshape(M, K)
    if k_pad != K:
        x2d = jnp.pad(x2d, ((0, 0), (0, k_pad - K)))

    # Pre-transpose the weight once to (K, N): one-time N*K copy, avoids any
    # per-iteration XLU transpose of the RHS tile inside the kernel.
    w2d = weight.T
    if (k_pad, n_pad) != (K, N):
        w2d = jnp.pad(w2d, ((0, k_pad - K), (0, n_pad - N)))

    b1d = bias
    if n_pad != N:
        b1d = jnp.pad(b1d, (0, n_pad - N))
    b2d = b1d.reshape(1, n_pad)

    # --- cost model (actual traffic, incl. weight re-read when K is tiled) --
    weight_reads = grid_m if k_tiles > 1 else 1
    cost = pl.CostEstimate(
        flops=2 * M * k_pad * n_pad,
        transcendentals=0,
        bytes_accessed=itemsize * (M * k_pad + weight_reads * k_pad * n_pad
                                   + M * n_pad) + 4 * n_pad,
    )

    acc_bytes = tm * n_pad * 4 if k_tiles > 1 else 0
    vmem_need = (
        2 * tm * tk * itemsize        # x tiles (double-buffered)
        + 2 * tm * n_pad * itemsize   # out tiles
        + 2 * tk * n_pad * itemsize   # weight
        + acc_bytes                   # f32 accumulator (only if K tiled)
        + 2 * n_pad * 4               # bias
    )
    vmem_limit = int(min(max(vmem_need + (8 << 20), 32 << 20), limit_cap))

    if k_tiles == 1:
        out2d = pl.pallas_call(
            _linear_kernel_full_k,
            out_shape=jax.ShapeDtypeStruct((M, n_pad), dtype),
            grid=(grid_m,),
            in_specs=[
                pl.BlockSpec((tm, k_pad), lambda i: (i, 0)),
                # weight / bias: constant block index -> VMEM resident.
                pl.BlockSpec((k_pad, n_pad), lambda i: (0, 0)),
                pl.BlockSpec((1, n_pad), lambda i: (0, 0)),
            ],
            out_specs=pl.BlockSpec((tm, n_pad), lambda i: (i, 0)),
            compiler_params=pltpu.CompilerParams(
                dimension_semantics=("parallel",),
                vmem_limit_bytes=vmem_limit,
            ),
            cost_estimate=cost,
        )(x2d, w2d, b2d)
    else:
        # TODO(synk): for tiled K the weight is still re-streamed once per M
        # tile; avoiding that needs a pinned-weight manual pipeline.
        out2d = pl.pallas_call(
            _linear_kernel_tiled_k,
            out_shape=jax.ShapeDtypeStruct((M, n_pad), dtype),
            grid=(grid_m, k_tiles),
            in_specs=[
                pl.BlockSpec((tm, tk), lambda i, k: (i, k)),
                pl.BlockSpec((tk, n_pad), lambda i, k: (k, 0)),
                pl.BlockSpec((1, n_pad), lambda i, k: (0, 0)),
            ],
            out_specs=pl.BlockSpec((tm, n_pad), lambda i, k: (i, 0)),
            scratch_shapes=[pltpu.VMEM((tm, n_pad), jnp.float32)],
            compiler_params=pltpu.CompilerParams(
                dimension_semantics=("parallel", "arbitrary"),
                vmem_limit_bytes=vmem_limit,
            ),
            cost_estimate=cost,
        )(x2d, w2d, b2d)

    if n_pad != N:
        out2d = out2d[:, :N]
    return out2d.reshape(B, T // factor, N)


if __name__ == "__main__":
    # Small shapes consistent with the module's forward.
    B, T, D = 2, 8, 32
    factor = 2

    key = jax.random.PRNGKey(0)
    k_x, k_w, k_b = jax.random.split(key, 3)

    x = jax.random.normal(k_x, (B, T, D), dtype=jnp.float32)

    # Deterministic init mimicking nn.Linear (uniform in +/- 1/sqrt(fan_in)).
    fan_in = D * factor
    bound = 1.0 / (fan_in ** 0.5)
    weight = jax.random.uniform(
        k_w, (D, D * factor), dtype=jnp.float32, minval=-bound, maxval=bound
    )
    bias = jax.random.uniform(
        k_b, (D,), dtype=jnp.float32, minval=-bound, maxval=bound
    )

    fn = jax.jit(
        functools.partial(downsampling_lp, input_dim=D, factor=factor)
    )
    out = fn(x, weight, bias)
    out = jax.block_until_ready(out)

    # Reference check in plain JAX (same math as the PyTorch module).
    ref = x.reshape(B, T // factor, D * factor) @ weight.T + bias
    assert out.shape == (B, T // factor, D)
    assert jnp.allclose(out, ref, atol=1e-5, rtol=1e-5)

    print("KERNEL_OK")
</pallas_src>

<mosaic_0001>
module attributes {stable_mosaic.version = 11 : i64} {
  func.func @_linear_kernel_full_k(%arg0: i32, %arg1: memref<8x64xf32, #tpu.memory_space<vmem>>, %arg2: memref<64x128xf32, #tpu.memory_space<vmem>>, %arg3: memref<1x128xf32, #tpu.memory_space<vmem>>, %arg4: memref<8x128xf32, #tpu.memory_space<vmem>>) attributes {dimension_semantics = [#tpu.dimension_semantics<parallel>], iteration_bounds = array<i64: 1>, scalar_prefetch = 0 : i64, scratch_operands = 0 : i64, tpu.core_type = #tpu.core_type<tc>, window_params = [{transform_indices = @transform_0, window_bounds = array<i64: 8, 64>}, {pipeline_mode = #tpu.pipeline_mode<synchronous>, transform_indices = @transform_1, window_bounds = array<i64: 64, 128>}, {pipeline_mode = #tpu.pipeline_mode<synchronous>, transform_indices = @transform_2, window_bounds = array<i64: 1, 128>}, {transform_indices = @transform_3, window_bounds = array<i64: 8, 128>}]} {
    %c0 = arith.constant 0 : index
    %c0_0 = arith.constant 0 : index
    %0 = vector.load %arg1[%c0, %c0_0] : memref<8x64xf32, #tpu.memory_space<vmem>>, vector<8x64xf32>
    %c0_1 = arith.constant 0 : index
    %c0_2 = arith.constant 0 : index
    %1 = vector.load %arg2[%c0_1, %c0_2] : memref<64x128xf32, #tpu.memory_space<vmem>>, vector<64x128xf32>
    %cst = arith.constant dense<0.000000e+00> : vector<8x128xf32>
    %2 = tpu.matmul %0, %1, %cst {dimension_numbers = #tpu.dot_dimension_numbers<[1], [0], [0], [1], [0, 0, 1, 1], [], []>} : vector<8x64xf32>, vector<64x128xf32>, vector<8x128xf32> -> vector<8x128xf32>
    %c0_3 = arith.constant 0 : index
    %c0_4 = arith.constant 0 : index
    %3 = vector.load %arg3[%c0_3, %c0_4] : memref<1x128xf32, #tpu.memory_space<vmem>>, vector<1x128xf32>
    %4 = vector.broadcast %3 : vector<1x128xf32> to vector<8x128xf32>
    %5 = arith.addf %2, %4 : vector<8x128xf32>
    %c0_5 = arith.constant 0 : index
    %c0_6 = arith.constant 0 : index
    %6 = vector.load %arg4[%c0_5, %c0_6] : memref<8x128xf32, #tpu.memory_space<vmem>>, vector<8x128xf32>
    tpu.vector_store %arg4[%c0_5, %c0_6], %5 {strides = array<i32>} : memref<8x128xf32, #tpu.memory_space<vmem>>, vector<8x128xf32>,
    return
  }
  func.func @transform_0(%arg0: i32) -> (i32, i32) {
    %c0_i32 = arith.constant 0 : i32
    %c0_i32_0 = arith.constant 0 : i32
    return %arg0, %c0_i32 : i32, i32
  }
  func.func @transform_1(%arg0: i32) -> (i32, i32) {
    %c0_i32 = arith.constant 0 : i32
    %c0_i32_0 = arith.constant 0 : i32
    %c0_i32_1 = arith.constant 0 : i32
    return %c0_i32, %c0_i32_0 : i32, i32
  }
  func.func @transform_2(%arg0: i32) -> (i32, i32) {
    %c0_i32 = arith.constant 0 : i32
    %c0_i32_0 = arith.constant 0 : i32
    %c0_i32_1 = arith.constant 0 : i32
    return %c0_i32, %c0_i32_0 : i32, i32
  }
  func.func @transform_3(%arg0: i32) -> (i32, i32) {
    %c0_i32 = arith.constant 0 : i32
    %c0_i32_0 = arith.constant 0 : i32
    return %arg0, %c0_i32 : i32, i32
  }
}

</mosaic_0001>

<llo_original>
// kernel: downsampling_lp.1
$region0: #{downsampling_lp.1}
  #allocation0 [shape = 'u32[]', space=smem, size = 0x4, offset = 0x4, fixed_abs, tag = 'smem constant byte address 0x4 - core index']
  #allocation1 [shape = 'u32[144,128]{1,0:T(1,128)}', space=vmem, size = 0x12000, scoped, tag = 'internal scratch']
  %s0 = inlined_call_operand.vmem [shape: f32[8,64], index: 0, kind: input, shape index: {}]
  %s1 = inlined_call_operand.vmem [shape: f32[64,128], index: 1, kind: input, shape index: {}]
  %s2 = inlined_call_operand.vmem [shape: f32[1,128], index: 2, kind: input, shape index: {}]
  %s3 = inlined_call_operand.hbm [shape: f32[8,128], index: 3, kind: output, shape index: {}]
  %s4 = sld [smem:[#allocation0]]
  $region22: #{downsampling_lp.1} parent=0
    _
  %s6 = ssub.s32 1, %s4
  %s7 = scalar_select 0, %s6, %s4
  $region1: #{downsampling_lp.1} parent=0
    #allocation2 [shape = 'u8[4096]{0}', space=vmem, size = 0x1000, scoped, tag = 'output window, operand 0, single buffered']
    #allocation3 [shape = 's32[1]{0}', space=sflag, size = 0x4, scoped, tag = 'scoped memory for downsampling_lp.1']
    %8 = vsyncpa [#allocation3], 0
    // Predicated region
    $region2: #{downsampling_lp.1} parent=1 // pred_check
      _
    $region3: #{downsampling_lp.1} parent=1 // pred_check_branch
      %10 = sbr.rel (0) target = $region5
    $region4: #{downsampling_lp.1} parent=1 // pred_region
      _
    $region5: #{downsampling_lp.1} parent=1 // pred_fallthru
      _
    // Predicated region
    $region6: #{downsampling_lp.1} parent=1 // pred_check
      _
    $region7: #{downsampling_lp.1} parent=1 // pred_check_branch
      %12 = sbr.rel (0) target = $region9
    $region8: #{downsampling_lp.1} parent=1 // pred_region
      _
    $region9: #{downsampling_lp.1} parent=1 // pred_fallthru
      _
    // Predicated region
    $region10: #{downsampling_lp.1} parent=1 // pred_check
      _
    $region11: #{downsampling_lp.1} parent=1 // pred_check_branch
      %14 = sbr.rel (0) target = $region13
    $region12: #{downsampling_lp.1} parent=1 // pred_region
      _
    $region13: #{downsampling_lp.1} parent=1 // pred_fallthru
      _
    %v15 = vld [vmem:[%s0] sm:$0xff]
    %v16 = vld [vmem:[%s1] sm:$0xff]
    %v17 = vld [vmem:[%s1 + $0x8] sm:$0xff]
    %v18 = vld [vmem:[%s1 + $0x10] sm:$0xff]
    %v19 = vld [vmem:[%s1 + $0x18] sm:$0xff]
    %v20 = vld [vmem:[%s1 + $0x20] sm:$0xff]
    %v21 = vld [vmem:[%s1 + $0x28] sm:$0xff]
    %v22 = vld [vmem:[%s1 + $0x30] sm:$0xff]
    %v23 = vld [vmem:[%s1 + $0x38] sm:$0xff]
    %v24 = vld [vmem:[%s2] sm:$0x1]
    %v26 = vlaneseq
    %v27 = vshrl.u32 %v26, 7
    %v28 = vsub.s32 0, %v27
    %v29 = vrot.slane %v24, %v28
    %vm31 = vcmask 523264
    %v33 = vsel %vm31, %v15, 0
    %35 = vmatprep.subr.mxu0 0.0
    %36 = vmatpush1.msra.mxu0 %v16
    %37 = vmatprep.subr.mxu0 0.0
    %38 = vmatpush1.msra.mxu0 %v17
    %39 = vmatprep.subr.mxu0 0.0
    %40 = vmatpush1.msra.mxu0 %v18
    %41 = vmatprep.subr.mxu0 0.0
    %42 = vmatpush1.msra.mxu0 %v19
    %43 = vmatprep.subr.mxu0 0.0
    %44 = vmatpush1.msra.mxu0 %v20
    %45 = vmatprep.subr.mxu0 0.0
    %46 = vmatpush1.msra.mxu0 %v21
    %47 = vmatprep.subr.mxu0 0.0
    %48 = vmatpush1.msra.mxu0 %v22
    %49 = vmatprep.subr.mxu0 0.0
    %50 = vmatpush1.msra.mxu0 %v23
    %51 = vmatprep.subr.mxu0 0.0
    %52 = vmatpush1.msra.mxu0 0.0
    %53 = vmatprep.subr.mxu0 0.0
    %54 = vmatpush1.msra.mxu0 0.0
    %55 = vmatprep.subr.mxu0 0.0
    %56 = vmatpush1.msra.mxu0 0.0
    %57 = vmatprep.subr.mxu0 0.0
    %58 = vmatpush1.msra.mxu0 0.0
    %59 = vmatprep.subr.mxu0 0.0
    %60 = vmatpush1.msra.mxu0 0.0
    %61 = vmatprep.subr.mxu0 0.0
    %62 = vmatpush1.msra.mxu0 0.0
    %63 = vmatprep.subr.mxu0 0.0
    %64 = vmatpush1.msra.mxu0 0.0
    %65 = vmatprep.subr.mxu0 0.0
    %66 = vmatpush1.msra.mxu0 0.0
    %67 = vmatprep.subr.mxu0 0.0
    %68 = vmatpush1.msra.mxu0 0.0
    %69 = vmatprep.subr.mxu0 0.0
    %70 = vmatpush1.msra.mxu0 0.0
    %71 = vmatprep.subr.mxu0 0.0
    %72 = vmatpush1.msra.mxu0 0.0
    %73 = vmatprep.subr.mxu0 0.0
    %74 = vmatpush1.msra.mxu0 0.0
    %75 = vmatprep.subr.mxu0 0.0
    %76 = vmatpush1.msra.mxu0 0.0
    %77 = vmatprep.subr.mxu0 0.0
    %78 = vmatpush1.msra.mxu0 0.0
    %79 = vmatprep.subr.mxu0 0.0
    %80 = vmatpush1.msra.mxu0 0.0
    %81 = vmatprep.subr.mxu0 0.0
    %82 = vmatpush1.msra.mxu0 0.0
    %83 = vmatprep.subr.mxu0 0.0
    %84 = vmatpush1.msra.mxu0 0.0
    %85 = vmatprep.subr.mxu0 0.0
    %86 = vmatpush1.msra.mxu0 0.0
    %87 = vmatprep.subr.mxu0 0.0
    %88 = vmatpush1.msra.mxu0 0.0
    %89 = vmatprep.subr.mxu0 0.0
    %90 = vmatpush1.msra.mxu0 0.0
    %91 = vmatprep.subr.mxu0 0.0
    %92 = vmatpush1.msra.mxu0 0.0
    %93 = vmatprep.subr.mxu0 0.0
    %94 = vmatpush1.msra.mxu0 0.0
    %95 = vmatprep.subr.mxu0 0.0
    %96 = vmatpush1.msra.mxu0 0.0
    %97 = vmatprep.subr.mxu0 0.0
    %98 = vmatpush1.msra.mxu0 0.0
    %99 = vmatprep.mubr.f32.mxu0 0.0
    %100 = vmatmul.mubr.f32.gmra.mrb[0].mxu0 %v33
    %v101 = vpop.f32.mrb[0].mxu0
    %v102 = vadd.f32 %v29, %v101
    %v103 = vpop.f32.mrb[0].mxu0
    %104 = vdwg.mxu0
    %105 = vst [vmem:[#allocation2] sm:$0xff] %v102
    // Predicated region
    $region14: #{downsampling_lp.1} parent=1 // pred_check
      _
    $region15: #{downsampling_lp.1} parent=1 // pred_check_branch
      %107 = sbr.rel (0) target = $region17
    $region16: #{downsampling_lp.1} parent=1 // pred_region
      %s109 = ssub.s32 128, 128
      %110 = vsyncadd [#allocation3], %s109
      %s112 = sshll.u32 [#allocation2], 4
      %s113 = int_to_ptr.vmem [resolvable:$true] %s112
      %115 = dma.vmem_to_hbm [thread:$0]  %s113, 128, %s3, [#allocation3]
    $region17: #{downsampling_lp.1} parent=1 // pred_fallthru
      _
    // Predicated region
    $region18: #{downsampling_lp.1} parent=1 // pred_check
      _
    $region19: #{downsampling_lp.1} parent=1 // pred_check_branch
      %117 = sbr.rel (0) target = $region21
    $region20: #{downsampling_lp.1} parent=1 // pred_region
      %118 = dma.done [#allocation3], 128
    $region21: #{downsampling_lp.1} parent=1 // pred_fallthru
      _
    %119 = vsyncpa [#allocation3], 1

</llo_original>
